<compile_context>
chip_gen: v6e
topology: v6e:2x2x1
jax: 0.10.0
libtpu: 0.0.40
codegen_flags: <defaults>
</compile_context>

<pallas_src>
import jax
import jax.numpy as jnp
from jax.experimental import pallas as pl
from jax.experimental.pallas import tpu as pltpu


_LANES = 1024      # lane width (multiple of 128 -> unmasked full-width stores)
_TILE_ROWS = 512   # (512, 1024) f32 block = 2 MiB; 8 MiB total double-buffered


def _copy_kernel(x_ref, o_ref):
    o_ref[...] = x_ref[...]


def _copy_2d(x2):
    """Tiled HBM->VMEM->HBM copy of a 2D lane-dense slab."""
    rows, lanes = x2.shape
    # Full-dim block when small (always legal); otherwise 512 rows (mult. of 8).
    tile_rows = rows if rows <= _TILE_ROWS else _TILE_ROWS
    grid = (pl.cdiv(rows, tile_rows),)
    nbytes = x2.size * x2.dtype.itemsize
    return pl.pallas_call(
        _copy_kernel,
        out_shape=jax.ShapeDtypeStruct(x2.shape, x2.dtype),
        grid=grid,
        in_specs=[pl.BlockSpec((tile_rows, lanes), lambda i: (i, 0))],
        out_specs=pl.BlockSpec((tile_rows, lanes), lambda i: (i, 0)),
        compiler_params=pltpu.CompilerParams(
            dimension_semantics=("parallel",)),   # shards across v7x's 2 TCs
        cost_estimate=pl.CostEstimate(
            flops=0, transcendentals=0, bytes_accessed=2 * nbytes),
    )(x2)


def identity(x):
    """Pallas identity: returns an array equal to x (same shape & dtype)."""
    n = x.size
    if n == 0:
        return x  # nothing to copy; a kernel boundary only adds overhead

    orig_shape = x.shape
    flat = x.reshape(-1)

    # Widest lane-dense 2D view (last dim a multiple of 128).
    lanes = None
    for cand in (_LANES, 512, 256, 128):
        if n % cand == 0:
            lanes = cand
            break

    if lanes is None:
        # TODO(synk): sizes not divisible by 128 would need a padded or
        # two-kernel path for very large arrays; a single full block is fine
        # for the small shapes this module sees.
        x2 = flat.reshape(1, n)
    else:
        x2 = flat.reshape(n // lanes, lanes)

    y2 = _copy_2d(x2)
    return y2.reshape(orig_shape)


# NOTE: no donate_argnums here so the caller's `x` stays valid for the check
# below.  In production, wrap in a larger jit (XLA elides the identity) or
# donate the argument if zero-traffic aliasing is ever reinstated.
identity_jit = jax.jit(identity)


if __name__ == "__main__":
    key = jax.random.PRNGKey(0)
    # Small NCHW input consistent with typical conv-style usage.
    x = jax.random.normal(key, (2, 4, 16, 16), dtype=jnp.float32)

    y = identity_jit(x)
    y = jax.block_until_ready(y)

    assert y.shape == x.shape and y.dtype == x.dtype
    assert bool(jnp.all(y == x))
    print("KERNEL_OK")
</pallas_src>

<mosaic_0001>
module attributes {stable_mosaic.version = 11 : i64} {
  func.func @_copy_kernel(%arg0: i32, %arg1: memref<2x1024xf32, #tpu.memory_space<vmem>>, %arg2: memref<2x1024xf32, #tpu.memory_space<vmem>>) attributes {dimension_semantics = [#tpu.dimension_semantics<parallel>], iteration_bounds = array<i64: 1>, scalar_prefetch = 0 : i64, scratch_operands = 0 : i64, tpu.core_type = #tpu.core_type<tc>, window_params = [{transform_indices = @transform_0, window_bounds = array<i64: 2, 1024>}, {transform_indices = @transform_1, window_bounds = array<i64: 2, 1024>}]} {
    %c0 = arith.constant 0 : index
    %c0_0 = arith.constant 0 : index
    %0 = vector.load %arg1[%c0, %c0_0] : memref<2x1024xf32, #tpu.memory_space<vmem>>, vector<2x1024xf32>
    %c0_1 = arith.constant 0 : index
    %c0_2 = arith.constant 0 : index
    %1 = vector.load %arg2[%c0_1, %c0_2] : memref<2x1024xf32, #tpu.memory_space<vmem>>, vector<2x1024xf32>
    tpu.vector_store %arg2[%c0_1, %c0_2], %0 {strides = array<i32>} : memref<2x1024xf32, #tpu.memory_space<vmem>>, vector<2x1024xf32>,
    return
  }
  func.func @transform_0(%arg0: i32) -> (i32, i32) {
    %c0_i32 = arith.constant 0 : i32
    %c0_i32_0 = arith.constant 0 : i32
    return %arg0, %c0_i32 : i32, i32
  }
  func.func @transform_1(%arg0: i32) -> (i32, i32) {
    %c0_i32 = arith.constant 0 : i32
    %c0_i32_0 = arith.constant 0 : i32
    return %arg0, %c0_i32 : i32, i32
  }
}

</mosaic_0001>

<llo_original>
// kernel: identity.1
$region0: #{identity.1}
  #allocation0 [shape = 'u32[]', space=smem, size = 0x4, offset = 0x4, fixed_abs, tag = 'smem constant byte address 0x4 - core index']
  #allocation1 [shape = 'u32[144,128]{1,0:T(1,128)}', space=vmem, size = 0x12000, scoped, tag = 'internal scratch']
  %s0 = inlined_call_operand.vmem [shape: f32[2,1024], index: 0, kind: input, shape index: {}]
  %s1 = inlined_call_operand.vmem [shape: f32[2,1024], index: 1, kind: output, shape index: {}]
  %s2 = sld [smem:[#allocation0]]
  $region14: #{identity.1} parent=0
    _
  %s4 = ssub.s32 1, %s2
  %s5 = scalar_select 0, %s4, %s2
  // Predicated region
  $region2: #{identity.1} parent=0 // pred_check
    _
  $region3: #{identity.1} parent=0 // pred_check_branch
    %7 = sbr.rel (0) target = $region5
  $region4: #{identity.1} parent=0 // pred_region
    _
  $region5: #{identity.1} parent=0 // pred_fallthru
    _
  %v8 = vld [vmem:[%s0] sm:$0xff]
  %v9 = vld [vmem:[%s0 + $0x8] sm:$0xff]
  %10 = vst [vmem:[%s1] sm:$0xff] %v8
  %11 = vst [vmem:[%s1 + $0x8] sm:$0xff] %v9
  // Predicated region
  $region6: #{identity.1} parent=0 // pred_check
    _
  $region7: #{identity.1} parent=0 // pred_check_branch
    %13 = sbr.rel (0) target = $region9
  $region8: #{identity.1} parent=0 // pred_region
    _
  $region9: #{identity.1} parent=0 // pred_fallthru
    _
  // Predicated region
  $region10: #{identity.1} parent=0 // pred_check
    _
  $region11: #{identity.1} parent=0 // pred_check_branch
    %15 = sbr.rel (0) target = $region13
  $region12: #{identity.1} parent=0 // pred_region
    _
  $region13: #{identity.1} parent=0 // pred_fallthru
    _

</llo_original>
